<compile_context>
chip_gen: v5e
topology: v5e:2x2
jax: 0.10.0
libtpu: 0.0.40
codegen_flags: <defaults>
</compile_context>

<pallas_src>
import functools

import jax
import jax.numpy as jnp
from jax import lax
from jax.experimental import pallas as pl
from jax.experimental.pallas import tpu as pltpu


# ----------------------------- Pallas kernels -------------------------------
def _conv_stats_kernel(xw_ref, w_ref, y_ref, st_ref, *, wo):
    """Pass 1: 4-tap space-to-depth conv + per-image BN partial statistics.

    xw_ref: (1, 2, KB, HB*Wo) bf16  two width-shifted, row-flattened
                                    space-to-depth views of the padded image
                                    (KB = 4*cin, HB = Ho + 1)
    w_ref : (4, OC, KB)       bf16  per-tap packed conv weights
    y_ref : (1, OC, Ho*Wo)    bf16  conv output (lane axis = flattened space)
    st_ref: (1, OC, 2)        f32   [:,:,0] = per-image sum,
                                    [:,:,1] = sum of squared deviations from
                                    the per-image mean (Chan combine later)
    """
    hw = y_ref.shape[-1]
    acc = None
    for dj in range(2):
        x_dj = xw_ref[0, dj]                                    # [KB, HB*Wo]
        for di in range(2):
            x_tap = x_dj[:, di * wo:di * wo + hw]               # [KB, Ho*Wo]
            part = jnp.dot(w_ref[2 * di + dj], x_tap,
                           preferred_element_type=jnp.float32)  # MXU, f32 acc
            acc = part if acc is None else acc + part
    y_ref[0] = acc.astype(y_ref.dtype)

    # Partial stats from the f32 accumulator (unaffected by the bf16 cast).
    tsum = jnp.sum(acc, axis=1, keepdims=True)                  # [OC, 1]
    dev = acc - tsum * (1.0 / hw)
    st_ref[0, :, 0:1] = tsum
    st_ref[0, :, 1:2] = jnp.sum(dev * dev, axis=1, keepdims=True)


def _bn_relu_kernel(y_ref, sc_ref, sh_ref, o_ref):
    """Pass 2: y * scale + shift (folded per-channel BN), then ReLU."""
    y = y_ref[0].astype(jnp.float32)
    o_ref[0] = jnp.maximum(y * sc_ref[...] + sh_ref[...], 0.0)


# ------------------------------ glue (JAX) ----------------------------------
def add_coords(x):
    """Append x/y coordinate channels in [-1, 1] (standard CoordConv)."""
    n, _, h, w = x.shape
    xx = jnp.linspace(-1.0, 1.0, w, dtype=x.dtype)
    yy = jnp.linspace(-1.0, 1.0, h, dtype=x.dtype)
    xx_ch = jnp.broadcast_to(xx[None, None, None, :], (n, 1, h, w))
    yy_ch = jnp.broadcast_to(yy[None, None, :, None], (n, 1, h, w))
    return jnp.concatenate([x, xx_ch, yy_ch], axis=1)


def _space_to_depth_views(xc, ho, wo):
    """Padded input -> two width-shifted, row-flattened space-to-depth views.

    Returns xw[N, 2, 4*cin, (Ho+1)*Wo] (bf16) such that for tap offsets
    (di, dj) in {0,1}^2 the conv rhs is the contiguous lane slice
    xw[n, dj, :, di*Wo : di*Wo + Ho*Wo].
    """
    n, cin, _, _ = xc.shape
    hb, wb = ho + 1, wo + 1
    xp = jnp.pad(xc, ((0, 0), (0, 0), (1, 1), (1, 1)))
    # [n,c,2hb,2wb] -> [n,c,hb,2,wb,2] -> [n,c,2,2,hb,wb] -> [n, 4c, hb, wb]
    xb = (xp.reshape(n, cin, hb, 2, wb, 2)
            .transpose(0, 1, 3, 5, 2, 4)
            .reshape(n, 4 * cin, hb, wb))
    views = [xb[:, :, :, dj:dj + wo].reshape(n, 4 * cin, hb * wo)
             for dj in (0, 1)]
    return jnp.stack(views, axis=1).astype(jnp.bfloat16)


def _pack_weight(weight):
    """[oc, cin, 4, 4] -> [4, oc, 4*cin]; tap t = di*2+dj, K = c*4 + r*2 + s,
    where (kh, kw) = (2*di + r, 2*dj + s)."""
    oc, cin, _, _ = weight.shape
    w6 = weight.reshape(oc, cin, 2, 2, 2, 2)        # (o, c, di, r, dj, s)
    return (w6.transpose(2, 4, 0, 1, 3, 5)           # (di, dj, o, c, r, s)
              .reshape(4, oc, 4 * cin)
              .astype(jnp.bfloat16))


def down_forward(x, weight, bias, gamma, beta, eps=1e-5):
    """x: [N, in_c, H, W]; weight: [out_c, in_c+2, 4, 4] (PyTorch OIHW)."""
    del bias  # exactly cancelled by BN's batch-mean subtraction (train mode)
    n, _, h, w = x.shape
    oc, cin = weight.shape[0], weight.shape[1]
    ho, wo = h // 2, w // 2
    hw = ho * wo
    kb = 4 * cin
    hbwo = (ho + 1) * wo

    xc = add_coords(x)
    assert xc.shape[1] == cin, (xc.shape, weight.shape)
    xw = _space_to_depth_views(xc, ho, wo)           # [n, 2, kb, (ho+1)*wo] bf16
    w4 = _pack_weight(weight)                        # [4, oc, kb]           bf16

    cparams = pltpu.CompilerParams(dimension_semantics=("parallel",))

    # ---- pass 1: in-kernel conv (4 tap matmuls) + per-image partial stats --
    kern1 = functools.partial(_conv_stats_kernel, wo=wo)
    y_int, stats = pl.pallas_call(
        kern1,
        grid=(n,),
        in_specs=[
            pl.BlockSpec((1, 2, kb, hbwo), lambda b: (b, 0, 0, 0)),
            pl.BlockSpec((4, oc, kb), lambda b: (0, 0, 0)),
        ],
        out_specs=[
            pl.BlockSpec((1, oc, hw), lambda b: (b, 0, 0)),
            pl.BlockSpec((1, oc, 2), lambda b: (b, 0, 0)),
        ],
        out_shape=[
            jax.ShapeDtypeStruct((n, oc, hw), jnp.bfloat16),
            jax.ShapeDtypeStruct((n, oc, 2), jnp.float32),
        ],
        compiler_params=cparams,
    )(xw, w4)

    # ---- combine per-image stats (Chan's parallel variance, exact, f32) ----
    m_total = n * hw
    tsum = stats[:, :, 0]                            # [n, oc]
    tm2 = stats[:, :, 1]                             # [n, oc]
    mean = jnp.sum(tsum, axis=0) / m_total           # [oc]
    img_mean = tsum / hw
    m2 = jnp.sum(tm2, axis=0) + hw * jnp.sum((img_mean - mean[None, :]) ** 2, axis=0)
    var = m2 / m_total                               # biased var (BN fwd)
    scale = gamma * lax.rsqrt(var + eps)             # [oc]
    shift = beta - mean * scale                      # [oc]

    # ---- pass 2: folded per-channel scale/shift + ReLU ----------------------
    out = pl.pallas_call(
        _bn_relu_kernel,
        grid=(n,),
        in_specs=[
            pl.BlockSpec((1, oc, hw), lambda b: (b, 0, 0)),
            pl.BlockSpec((oc, 1), lambda b: (0, 0)),
            pl.BlockSpec((oc, 1), lambda b: (0, 0)),
        ],
        out_specs=pl.BlockSpec((1, oc, hw), lambda b: (b, 0, 0)),
        out_shape=jax.ShapeDtypeStruct((n, oc, hw), jnp.float32),
        compiler_params=cparams,
    )(y_int, scale.reshape(oc, 1), shift.reshape(oc, 1))

    # [N, oc, Ho*Wo] -> NCHW is a free reshape (no transpose pass).
    return out.reshape(n, oc, ho, wo)


# -------------------------- pure-JAX reference -------------------------------
def down_reference(x, weight, bias, gamma, beta, eps=1e-5):
    xc = add_coords(x)
    y = lax.conv_general_dilated(
        xc, weight, window_strides=(2, 2), padding=((1, 1), (1, 1)),
        dimension_numbers=("NCHW", "OIHW", "NCHW"))
    y = y + bias[None, :, None, None]
    mean = y.mean(axis=(0, 2, 3), keepdims=True)
    var = y.var(axis=(0, 2, 3), keepdims=True)   # biased, matches BN training fwd
    y = (y - mean) / jnp.sqrt(var + eps)
    y = y * gamma[None, :, None, None] + beta[None, :, None, None]
    return jnp.maximum(y, 0.0)


# ---------------------------------- main --------------------------------------
if __name__ == "__main__":
    in_c, out_c = 4, 8
    n, h, w = 2, 16, 16

    key = jax.random.PRNGKey(0)
    kx, kw_, kb, kg, kbe = jax.random.split(key, 5)

    x = jax.random.normal(kx, (n, in_c, h, w), dtype=jnp.float32)
    weight = 0.1 * jax.random.normal(kw_, (out_c, in_c + 2, 4, 4), dtype=jnp.float32)
    bias = 0.1 * jax.random.normal(kb, (out_c,), dtype=jnp.float32)
    gamma = 1.0 + 0.1 * jax.random.normal(kg, (out_c,), dtype=jnp.float32)
    beta = 0.1 * jax.random.normal(kbe, (out_c,), dtype=jnp.float32)

    down = jax.jit(down_forward)
    out = down(x, weight, bias, gamma, beta)
    out = jax.block_until_ready(out)

    ref = down_reference(x, weight, bias, gamma, beta)
    assert out.shape == (n, out_c, h // 2, w // 2), out.shape
    # bf16 MXU operands + bf16 conv intermediate give ~2^-8-level relative
    # error on the pre-BN activations (|y| ~ O(1..3)), so tolerance is set to
    # the bf16 quantization level rather than f32's 1e-3.
    err = float(jnp.max(jnp.abs(out - ref)))
    assert jnp.allclose(out, ref, atol=5e-2, rtol=2e-2), err

    print("KERNEL_OK")
</pallas_src>

<mosaic_0001>
module attributes {stable_mosaic.version = 11 : i64} {
  func.func @_conv_stats_kernel(%arg0: i32, %arg1: memref<1x2x24x72xbf16, #tpu.memory_space<vmem>>, %arg2: memref<4x8x24xbf16, #tpu.memory_space<vmem>>, %arg3: memref<1x8x64xbf16, #tpu.memory_space<vmem>>, %arg4: memref<1x8x2xf32, #tpu.memory_space<vmem>>) attributes {dimension_semantics = [#tpu.dimension_semantics<parallel>], iteration_bounds = array<i64: 2>, scalar_prefetch = 0 : i64, scratch_operands = 0 : i64, tpu.core_type = #tpu.core_type<tc>, window_params = [{transform_indices = @transform_0, window_bounds = array<i64: 1, 2, 24, 72>}, {pipeline_mode = #tpu.pipeline_mode<synchronous>, transform_indices = @transform_1, window_bounds = array<i64: 4, 8, 24>}, {transform_indices = @transform_2, window_bounds = array<i64: 1, 8, 64>}, {transform_indices = @transform_3, window_bounds = array<i64: 1, 8, 2>}]} {
    %c0 = arith.constant 0 : index
    %c0_0 = arith.constant 0 : index
    %c0_1 = arith.constant 0 : index
    %c0_2 = arith.constant 0 : index
    %0 = vector.load %arg1[%c0, %c0_0, %c0_1, %c0_2] : memref<1x2x24x72xbf16, #tpu.memory_space<vmem>>, vector<1x1x24x72xbf16>
    %1 = vector.shape_cast %0 : vector<1x1x24x72xbf16> to vector<24x72xbf16>
    %2 = vector.extract_strided_slice %1 {offsets = [0, 0], sizes = [24, 64], strides = [1, 1]} : vector<24x72xbf16> to vector<24x64xbf16>
    %c0_3 = arith.constant 0 : index
    %c0_4 = arith.constant 0 : index
    %c0_5 = arith.constant 0 : index
    %3 = vector.load %arg2[%c0_3, %c0_4, %c0_5] : memref<4x8x24xbf16, #tpu.memory_space<vmem>>, vector<1x8x24xbf16>
    %4 = vector.shape_cast %3 : vector<1x8x24xbf16> to vector<8x24xbf16>
    %cst = arith.constant dense<0.000000e+00> : vector<8x64xf32>
    %5 = tpu.matmul %4, %2, %cst {dimension_numbers = #tpu.dot_dimension_numbers<[1], [0], [0], [1], [0, 0, 1, 1], [], []>} : vector<8x24xbf16>, vector<24x64xbf16>, vector<8x64xf32> -> vector<8x64xf32>
    %6 = vector.extract_strided_slice %1 {offsets = [0, 8], sizes = [24, 64], strides = [1, 1]} : vector<24x72xbf16> to vector<24x64xbf16>
    %c2 = arith.constant 2 : index
    %c0_6 = arith.constant 0 : index
    %c0_7 = arith.constant 0 : index
    %7 = vector.load %arg2[%c2, %c0_6, %c0_7] : memref<4x8x24xbf16, #tpu.memory_space<vmem>>, vector<1x8x24xbf16>
    %8 = vector.shape_cast %7 : vector<1x8x24xbf16> to vector<8x24xbf16>
    %cst_8 = arith.constant dense<0.000000e+00> : vector<8x64xf32>
    %9 = tpu.matmul %8, %6, %cst_8 {dimension_numbers = #tpu.dot_dimension_numbers<[1], [0], [0], [1], [0, 0, 1, 1], [], []>} : vector<8x24xbf16>, vector<24x64xbf16>, vector<8x64xf32> -> vector<8x64xf32>
    %10 = arith.addf %5, %9 : vector<8x64xf32>
    %c0_9 = arith.constant 0 : index
    %c1 = arith.constant 1 : index
    %c0_10 = arith.constant 0 : index
    %c0_11 = arith.constant 0 : index
    %11 = vector.load %arg1[%c0_9, %c1, %c0_10, %c0_11] : memref<1x2x24x72xbf16, #tpu.memory_space<vmem>>, vector<1x1x24x72xbf16>
    %12 = vector.shape_cast %11 : vector<1x1x24x72xbf16> to vector<24x72xbf16>
    %13 = vector.extract_strided_slice %12 {offsets = [0, 0], sizes = [24, 64], strides = [1, 1]} : vector<24x72xbf16> to vector<24x64xbf16>
    %c1_12 = arith.constant 1 : index
    %c0_13 = arith.constant 0 : index
    %c0_14 = arith.constant 0 : index
    %14 = vector.load %arg2[%c1_12, %c0_13, %c0_14] : memref<4x8x24xbf16, #tpu.memory_space<vmem>>, vector<1x8x24xbf16>
    %15 = vector.shape_cast %14 : vector<1x8x24xbf16> to vector<8x24xbf16>
    %cst_15 = arith.constant dense<0.000000e+00> : vector<8x64xf32>
    %16 = tpu.matmul %15, %13, %cst_15 {dimension_numbers = #tpu.dot_dimension_numbers<[1], [0], [0], [1], [0, 0, 1, 1], [], []>} : vector<8x24xbf16>, vector<24x64xbf16>, vector<8x64xf32> -> vector<8x64xf32>
    %17 = arith.addf %10, %16 : vector<8x64xf32>
    %18 = vector.extract_strided_slice %12 {offsets = [0, 8], sizes = [24, 64], strides = [1, 1]} : vector<24x72xbf16> to vector<24x64xbf16>
    %c3 = arith.constant 3 : index
    %c0_16 = arith.constant 0 : index
    %c0_17 = arith.constant 0 : index
    %19 = vector.load %arg2[%c3, %c0_16, %c0_17] : memref<4x8x24xbf16, #tpu.memory_space<vmem>>, vector<1x8x24xbf16>
    %20 = vector.shape_cast %19 : vector<1x8x24xbf16> to vector<8x24xbf16>
    %cst_18 = arith.constant dense<0.000000e+00> : vector<8x64xf32>
    %21 = tpu.matmul %20, %18, %cst_18 {dimension_numbers = #tpu.dot_dimension_numbers<[1], [0], [0], [1], [0, 0, 1, 1], [], []>} : vector<8x24xbf16>, vector<24x64xbf16>, vector<8x64xf32> -> vector<8x64xf32>
    %22 = arith.addf %17, %21 : vector<8x64xf32>
    %23 = arith.truncf %22 : vector<8x64xf32> to vector<8x64xbf16>
    %c0_19 = arith.constant 0 : index
    %c0_20 = arith.constant 0 : index
    %c0_21 = arith.constant 0 : index
    %24 = vector.load %arg3[%c0_19, %c0_20, %c0_21] : memref<1x8x64xbf16, #tpu.memory_space<vmem>>, vector<1x8x64xbf16>
    %25 = vector.shape_cast %24 : vector<1x8x64xbf16> to vector<8x64xbf16>
    %26 = vector.shape_cast %23 : vector<8x64xbf16> to vector<1x8x64xbf16>
    tpu.vector_store %arg3[%c0_19, %c0_20, %c0_21], %26 {strides = array<i32>} : memref<1x8x64xbf16, #tpu.memory_space<vmem>>, vector<1x8x64xbf16>,
    %cst_22 = arith.constant dense<0.000000e+00> : vector<8xf32>
    %27 = vector.multi_reduction <add>, %22, %cst_22 [1] : vector<8x64xf32> to vector<8xf32>
    %28 = vector.shape_cast %27 : vector<8xf32> to vector<8x1xf32>
    %cst_23 = arith.constant 1.562500e-02 : f32
    %29 = vector.broadcast %cst_23 : f32 to vector<8x1xf32>
    %30 = arith.mulf %28, %29 : vector<8x1xf32>
    %31 = vector.broadcast %30 : vector<8x1xf32> to vector<8x64xf32>
    %32 = arith.subf %22, %31 : vector<8x64xf32>
    %c0_24 = arith.constant 0 : index
    %c0_25 = arith.constant 0 : index
    %c0_26 = arith.constant 0 : index
    %33 = vector.load %arg4[%c0_24, %c0_25, %c0_26] : memref<1x8x2xf32, #tpu.memory_space<vmem>>, vector<1x8x1xf32>
    %34 = vector.shape_cast %33 : vector<1x8x1xf32> to vector<8x1xf32>
    %35 = vector.shape_cast %28 : vector<8x1xf32> to vector<1x8x1xf32>
    tpu.vector_store %arg4[%c0_24, %c0_25, %c0_26], %35 {strides = array<i32>} : memref<1x8x2xf32, #tpu.memory_space<vmem>>, vector<1x8x1xf32>,
    %36 = arith.mulf %32, %32 : vector<8x64xf32>
    %cst_27 = arith.constant dense<0.000000e+00> : vector<8xf32>
    %37 = vector.multi_reduction <add>, %36, %cst_27 [1] : vector<8x64xf32> to vector<8xf32>
    %38 = vector.shape_cast %37 : vector<8xf32> to vector<8x1xf32>
    %c0_28 = arith.constant 0 : index
    %c0_29 = arith.constant 0 : index
    %c1_30 = arith.constant 1 : index
    %39 = vector.load %arg4[%c0_28, %c0_29, %c1_30] : memref<1x8x2xf32, #tpu.memory_space<vmem>>, vector<1x8x1xf32>
    %40 = vector.shape_cast %39 : vector<1x8x1xf32> to vector<8x1xf32>
    %41 = vector.shape_cast %38 : vector<8x1xf32> to vector<1x8x1xf32>
    tpu.vector_store %arg4[%c0_28, %c0_29, %c1_30], %41 {strides = array<i32>} : memref<1x8x2xf32, #tpu.memory_space<vmem>>, vector<1x8x1xf32>,
    return
  }
  func.func @transform_0(%arg0: i32) -> (i32, i32, i32, i32) {
    %c0_i32 = arith.constant 0 : i32
    %c0_i32_0 = arith.constant 0 : i32
    %c0_i32_1 = arith.constant 0 : i32
    %c0_i32_2 = arith.constant 0 : i32
    return %arg0, %c0_i32, %c0_i32_0, %c0_i32_1 : i32, i32, i32, i32
  }
  func.func @transform_1(%arg0: i32) -> (i32, i32, i32) {
    %c0_i32 = arith.constant 0 : i32
    %c0_i32_0 = arith.constant 0 : i32
    %c0_i32_1 = arith.constant 0 : i32
    %c0_i32_2 = arith.constant 0 : i32
    return %c0_i32, %c0_i32_0, %c0_i32_1 : i32, i32, i32
  }
  func.func @transform_2(%arg0: i32) -> (i32, i32, i32) {
    %c0_i32 = arith.constant 0 : i32
    %c0_i32_0 = arith.constant 0 : i32
    %c0_i32_1 = arith.constant 0 : i32
    return %arg0, %c0_i32, %c0_i32_0 : i32, i32, i32
  }
  func.func @transform_3(%arg0: i32) -> (i32, i32, i32) {
    %c0_i32 = arith.constant 0 : i32
    %c0_i32_0 = arith.constant 0 : i32
    %c0_i32_1 = arith.constant 0 : i32
    return %arg0, %c0_i32, %c0_i32_0 : i32, i32, i32
  }
}

module attributes {stable_mosaic.version = 11 : i64} {
  func.func @_bn_relu_kernel(%arg0: i32, %arg1: memref<1x8x64xbf16, #tpu.memory_space<vmem>>, %arg2: memref<8x1xf32, #tpu.memory_space<vmem>>, %arg3: memref<8x1xf32, #tpu.memory_space<vmem>>, %arg4: memref<1x8x64xf32, #tpu.memory_space<vmem>>) attributes {dimension_semantics = [#tpu.dimension_semantics<parallel>], iteration_bounds = array<i64: 2>, scalar_prefetch = 0 : i64, scratch_operands = 0 : i64, tpu.core_type = #tpu.core_type<tc>, window_params = [{transform_indices = @transform_0, window_bounds = array<i64: 1, 8, 64>}, {pipeline_mode = #tpu.pipeline_mode<synchronous>, transform_indices = @transform_1, window_bounds = array<i64: 8, 1>}, {pipeline_mode = #tpu.pipeline_mode<synchronous>, transform_indices = @transform_2, window_bounds = array<i64: 8, 1>}, {transform_indices = @transform_3, window_bounds = array<i64: 1, 8, 64>}]} {
    %c0 = arith.constant 0 : index
    %c0_0 = arith.constant 0 : index
    %c0_1 = arith.constant 0 : index
    %0 = vector.load %arg1[%c0, %c0_0, %c0_1] : memref<1x8x64xbf16, #tpu.memory_space<vmem>>, vector<1x8x64xbf16>
    %1 = vector.shape_cast %0 : vector<1x8x64xbf16> to vector<8x64xbf16>
    %2 = arith.extf %1 : vector<8x64xbf16> to vector<8x64xf32>
    %c0_2 = arith.constant 0 : index
    %c0_3 = arith.constant 0 : index
    %3 = vector.load %arg2[%c0_2, %c0_3] : memref<8x1xf32, #tpu.memory_space<vmem>>, vector<8x1xf32>
    %4 = vector.broadcast %3 : vector<8x1xf32> to vector<8x64xf32>
    %5 = arith.mulf %2, %4 : vector<8x64xf32>
    %c0_4 = arith.constant 0 : index
    %c0_5 = arith.constant 0 : index
    %6 = vector.load %arg3[%c0_4, %c0_5] : memref<8x1xf32, #tpu.memory_space<vmem>>, vector<8x1xf32>
    %7 = vector.broadcast %6 : vector<8x1xf32> to vector<8x64xf32>
    %8 = arith.addf %5, %7 : vector<8x64xf32>
    %cst = arith.constant 0.000000e+00 : f32
    %9 = vector.broadcast %cst : f32 to vector<8x64xf32>
    %10 = arith.maximumf %8, %9 : vector<8x64xf32>
    %c0_6 = arith.constant 0 : index
    %c0_7 = arith.constant 0 : index
    %c0_8 = arith.constant 0 : index
    %11 = vector.load %arg4[%c0_6, %c0_7, %c0_8] : memref<1x8x64xf32, #tpu.memory_space<vmem>>, vector<1x8x64xf32>
    %12 = vector.shape_cast %11 : vector<1x8x64xf32> to vector<8x64xf32>
    %13 = vector.shape_cast %10 : vector<8x64xf32> to vector<1x8x64xf32>
    tpu.vector_store %arg4[%c0_6, %c0_7, %c0_8], %13 {strides = array<i32>} : memref<1x8x64xf32, #tpu.memory_space<vmem>>, vector<1x8x64xf32>,
    return
  }
  func.func @transform_0(%arg0: i32) -> (i32, i32, i32) {
    %c0_i32 = arith.constant 0 : i32
    %c0_i32_0 = arith.constant 0 : i32
    %c0_i32_1 = arith.constant 0 : i32
    return %arg0, %c0_i32, %c0_i32_0 : i32, i32, i32
  }
  func.func @transform_1(%arg0: i32) -> (i32, i32) {
    %c0_i32 = arith.constant 0 : i32
    %c0_i32_0 = arith.constant 0 : i32
    %c0_i32_1 = arith.constant 0 : i32
    return %c0_i32, %c0_i32_0 : i32, i32
  }
  func.func @transform_2(%arg0: i32) -> (i32, i32) {
    %c0_i32 = arith.constant 0 : i32
    %c0_i32_0 = arith.constant 0 : i32
    %c0_i32_1 = arith.constant 0 : i32
    return %c0_i32, %c0_i32_0 : i32, i32
  }
  func.func @transform_3(%arg0: i32) -> (i32, i32, i32) {
    %c0_i32 = arith.constant 0 : i32
    %c0_i32_0 = arith.constant 0 : i32
    %c0_i32_1 = arith.constant 0 : i32
    return %arg0, %c0_i32, %c0_i32_0 : i32, i32, i32
  }
}

</mosaic_0001>

<llo_original>
// kernel: down_forward.2
$region0: #{down_forward.2}
  #allocation0 [shape = 'u32[]', space=smem, size = 0x4, offset = 0x4, fixed_abs, tag = 'smem constant byte address 0x4 - core index']
  #allocation1 [shape = 'u32[72,128]{1,0:T(1,128)}', space=vmem, size = 0x9000, scoped, tag = 'internal scratch']
  %s0 = inlined_call_operand.vmem [shape: bf16[2,2,24,72], index: 0, kind: input, shape index: {}]
  %s1 = inlined_call_operand.vmem [shape: bf16[4,8,24], index: 1, kind: input, shape index: {}]
  %s2 = inlined_call_operand.vmem [shape: bf16[2,8,64], index: 2, kind: output, shape index: {0}]
  %s3 = inlined_call_operand.vmem [shape: f32[2,8,2], index: 3, kind: output, shape index: {1}]
  %4 = xla_tuple %s2, %s3
  %s5 = sld [smem:[#allocation0]]
  $region49: #{down_forward.2} parent=0
    _
  %s7 = ssub.s32 1, %s5
  %s8 = scalar_select 0, %s7, %s5
  loop: start=0, step=1, limit=4
  $region2: #{down_forward.2} parent=0 // loop_pre_header
    _
  $region3: #{down_forward.2} parent=0 // loop_header
    %s10 = sphi 0, %s14
    %p11 = scmp.ge.s32.totalorder %s10, 4
    %s20 = sphi 0, %s22
    %s23 = sphi 0, %s20
    %s24 = sphi 0, %s23
    %s40 = sphi 0, %s24
    %s44 = sphi 0, %s44
    %s46 = sphi 0, %s44
    %s47 = sphi 0, %s46
    %s61 = sphi 0, %s47
    %s67 = sphi 0, %s69
    %s70 = sphi 0, %s67
    %s71 = sphi 0, %s70
    %s87 = sphi 0, %s71
    %s93 = sphi 0, %s95
    %s96 = sphi 0, %s93
    %s97 = sphi 0, %s96
    %s113 = sphi 0, %s97
  $region4: #{down_forward.2} parent=0 // loop_header_branch
    %13 = sbr.rel (%p11) target = $region8
  $region5: #{down_forward.2} parent=0 // loop_body
    %s15 = ssub.s32 %s10, 1
    %s16 = ssub.s32 %s10, 2
    %s17 = sadd.s32 %s10, 1
    %s18 = ssub.s32 %s10, %s17
    %p19 = scmp.eq.s32.totalorder %s18, 0
    %s21 = sadd.s32 %s20, 1
    %s22 = scalar_select %p19, %s20, %s21
    %p25 = pneg %p19
    %p26 = scmp.eq.s32.totalorder %s10, 1
    %p27 = por %p25, %p26
    %p28 = scmp.ne.s32.totalorder %s20, %s23
    %p29 = scmp.eq.s32.totalorder %s10, 0
    %p30 = por %p28, %p29
    %p31 = scmp.ne.s32.totalorder %s20, %s23
    %p32 = scmp.eq.s32.totalorder %s15, 1
    %p33 = por %p31, %p32
    %p34 = scmp.ne.s32.totalorder %s23, %s24
    %p35 = scmp.eq.s32.totalorder %s15, 0
    %p36 = por %p34, %p35
    %p37 = scmp.ne.s32.totalorder %s23, %s24
    %p38 = scmp.eq.s32.totalorder %s16, 1
    %p39 = por %p37, %p38
    %p41 = scmp.ne.s32.totalorder %s24, %s40
    %p42 = scmp.eq.s32.totalorder %s16, 0
    %p43 = por %p41, %p42
    %s45 = sadd.s32 %s44, 1
    %p48 = scmp.eq.s32.totalorder %s10, 1
    %p49 = scmp.ne.s32.totalorder %s44, %s46
    %p50 = scmp.eq.s32.totalorder %s10, 0
    %p51 = por %p49, %p50
    %p52 = scmp.ne.s32.totalorder %s44, %s46
    %p53 = scmp.eq.s32.totalorder %s15, 1
    %p54 = por %p52, %p53
    %p55 = scmp.ne.s32.totalorder %s46, %s47
    %p56 = scmp.eq.s32.totalorder %s15, 0
    %p57 = por %p55, %p56
    %p58 = scmp.ne.s32.totalorder %s46, %s47
    %p59 = scmp.eq.s32.totalorder %s16, 1
    %p60 = por %p58, %p59
    %p62 = scmp.ne.s32.totalorder %s47, %s61
    %p63 = scmp.eq.s32.totalorder %s16, 0
    %p64 = por %p62, %p63
    %s65 = ssub.s32 %s10, %s17
    %p66 = scmp.eq.s32.totalorder %s65, 0
    %s68 = sadd.s32 %s67, 1
    %s69 = scalar_select %p66, %s67, %s68
    %p72 = pneg %p66
    %p73 = scmp.eq.s32.totalorder %s10, 1
    %p74 = por %p72, %p73
    %p75 = scmp.ne.s32.totalorder %s67, %s70
    %p76 = scmp.eq.s32.totalorder %s10, 0
    %p77 = por %p75, %p76
    %p78 = scmp.ne.s32.totalorder %s67, %s70
    %p79 = scmp.eq.s32.totalorder %s15, 1
    %p80 = por %p78, %p79
    %p81 = scmp.ne.s32.totalorder %s70, %s71
    %p82 = scmp.eq.s32.totalorder %s15, 0
    %p83 = por %p81, %p82
    %p84 = scmp.ne.s32.totalorder %s70, %s71
    %p85 = scmp.eq.s32.totalorder %s16, 1
    %p86 = por %p84, %p85
    %p88 = scmp.ne.s32.totalorder %s71, %s87
    %p89 = scmp.eq.s32.totalorder %s16, 0
    %p90 = por %p88, %p89
    %s91 = ssub.s32 %s10, %s17
    %p92 = scmp.eq.s32.totalorder %s91, 0
    %s94 = sadd.s32 %s93, 1
    %s95 = scalar_select %p92, %s93, %s94
    %p98 = pneg %p92
    %p99 = scmp.eq.s32.totalorder %s10, 1
    %p100 = por %p98, %p99
    %p101 = scmp.ne.s32.totalorder %s93, %s96
    %p102 = scmp.eq.s32.totalorder %s10, 0
    %p103 = por %p101, %p102
    %p104 = scmp.ne.s32.totalorder %s93, %s96
    %p105 = scmp.eq.s32.totalorder %s15, 1
    %p106 = por %p104, %p105
    %p107 = scmp.ne.s32.totalorder %s96, %s97
    %p108 = scmp.eq.s32.totalorder %s15, 0
    %p109 = por %p107, %p108
    %p110 = scmp.ne.s32.totalorder %s96, %s97
    %p111 = scmp.eq.s32.totalorder %s16, 1
    %p112 = por %p110, %p111
    %p114 = scmp.ne.s32.totalorder %s97, %s113
    %p115 = scmp.eq.s32.totalorder %s16, 0
    %p116 = por %p114, %p115
    %p117 = scmp.le.s32.totalorder 1, %s10
    %p118 = scmp.lt.s32.totalorder %s10, 3
    %p119 = pnand %p117, %p118
    %p120 = pneg %p119
    // Predicated region
    $region9: #{down_forward.2} parent=5 // pred_check
      _
    $region10: #{down_forward.2} parent=5 // pred_check_branch
      %122 = sbr.rel (%p119) target = $region12
    $region11: #{down_forward.2} parent=5 // pred_region
      %s123 = ssub.s32 %s10, 1
      // Predicated region
      $region13: #{down_forward.2} parent=11 // pred_check
        %p124 = pneg %p57
      $region14: #{down_forward.2} parent=11 // pred_check_branch
        %126 = sbr.rel (%p124) target = $region16
      $region15: #{down_forward.2} parent=11 // pred_region
        _
      $region16: #{down_forward.2} parent=11 // pred_fallthru
        _
    $region12: #{down_forward.2} parent=5 // pred_fallthru
      _
    %p127 = scmp.lt.s32.totalorder %s10, 2
    // Predicated region
    $region17: #{down_forward.2} parent=5 // pred_check
      %p128 = pneg %p127
    $region18: #{down_forward.2} parent=5 // pred_check_branch
      %130 = sbr.rel (%p128) target = $region20
    $region19: #{down_forward.2} parent=5 // pred_region
      // Predicated region
      $region21: #{down_forward.2} parent=19 // pred_check
        %p131 = pneg %p30
      $region22: #{down_forward.2} parent=19 // pred_check_branch
        %133 = sbr.rel (%p131) target = $region24
      $region23: #{down_forward.2} parent=19 // pred_region
        %p134 = scmp.lt.s32.totalorder %s10, 1
        %s135 = scalar_select %p134, %s10, 1
        %s136 = smul.addr %s135, 6
        %s137 = smul.addr %s136, 4
        %s138 = scalar_lea.vmem %s0, %s137
      $region24: #{down_forward.2} parent=19 // pred_fallthru
        _
    $region20: #{down_forward.2} parent=5 // pred_fallthru
      _
    %p139 = scmp.le.s32.totalorder 1, %s10
    %p140 = scmp.lt.s32.totalorder %s10, 3
    %p141 = pnand %p139, %p140
    %p142 = pneg %p141
    // Predicated region
    $region25: #{down_forward.2} parent=5 // pred_check
      _
    $region26: #{down_forward.2} parent=5 // pred_check_branch
      %144 = sbr.rel (%p141) target = $region28
    $region27: #{down_forward.2} parent=5 // pred_region
      %s145 = ssub.s32 %s10, 1
      %p146 = scmp.lt.s32.totalorder %s15, 1
      %s147 = scalar_select %p146, %s15, 1
      %s148 = smul.addr %s147, 6
      %s149 = smul.addr %s148, 4
      %s150 = scalar_lea.vmem %s0, %s149
      %p151 = pneg %p36
      %p152 = pneg %p33
      %p153 = pneg %p57
      %p154 = pneg %p54
      %p155 = pneg %p83
      %p156 = pneg %p80
      %p157 = scmp.lt.s32.totalorder %s15, 1
      %s158 = scalar_select %p157, %s15, 1
      %s159 = smul.addr %s158, 4
      %s160 = scalar_lea.vmem %s2, %s159
      %p161 = pneg %p109
      %p162 = pneg %p106
      %p163 = scmp.lt.s32.totalorder %s15, 1
      %s164 = scalar_select %p163, %s15, 1
      %s165 = smul.addr %s164, 8
      %s166 = scalar_lea.vmem %s3, %s165
      %p167 = scmp.lt.s32.totalorder %s15, 1
      %s168 = scalar_select %p167, %s15, 1
      %s169 = smul.addr %s168, 6
      %s170 = smul.addr %s169, 4
      %s171 = scalar_lea.vmem %s0, %s170
      %p172 = scmp.lt.s32.totalorder %s15, 1
      %s173 = scalar_select %p172, %s15, 1
      %s174 = smul.addr %s173, 4
      %s175 = scalar_lea.vmem %s2, %s174
      %p176 = scmp.lt.s32.totalorder %s15, 1
      %s177 = scalar_select %p176, %s15, 1
      %s178 = smul.addr %s177, 8
      %s179 = scalar_lea.vmem %s3, %s178
      %v181 = vld [vmem:[%s171] sm:$0xf]
      %v182 = vld [vmem:[%s171 + $0x4] sm:$0xf]
      %v183 = vld [vmem:[%s171 + $0x8] sm:$0xf]
      %v184 = vld [vmem:[%s1] sm:$0xf]
      %s185 = scalar_lea.vmem %s1, 8
      %v186 = vld [vmem:[%s185] sm:$0xf]
      %v190 = vunpack.c.l.b16 %v181
      %v191 = vunpack.c.l.b16 %v182
      %v192 = vunpack.c.l.b16 %v183
      %v193 = vpack.c.b16 %v191, %v190
      %v194 = vpack.c.b16 %v192, %v192
      %195 = vrot.lane.b32.xlu0 %v193, 120
      %v196 = vpop.permute.xlu0 %195
      %197 = vrot.lane.b32.xlu0 %v194, 120
      %v198 = vpop.permute.xlu0 %197
      %vm200 = vcmask 195584
      %v202 = vsel %vm200, %v186, 0
      %vm204 = vcmask 1043456
      %v206 = vsel %vm204, %v198, 0
      %208 = vmatpush.bf16.msra.mxu0 0
      %209 = vmatpush.bf16.msra.mxu0 0
      %210 = vmatpush.bf16.msra.mxu0 0
      %211 = vmatpush.bf16.msra.mxu0 0
      %212 = vmatpush.bf16.msra.mxu0 0
      %213 = vmatpush.bf16.msra.mxu0 0
      %214 = vmatpush.bf16.msra.mxu0 %v206
      %215 = vmatpush.bf16.msra.mxu0 %v196
      %216 = vmatmul.bf16.gmra.mxu0 %v202
      %v217 = vpop.f32.mrf.mxu0
      %v218 = vadd.f32 0.0, %v217
      %v219 = vpop.f32.mrf.mxu0
      %220 = vdwg.mxu0
      %v223 = vsel %vm200, %v184, 0
      %v226 = vsel %vm204, %v194, 0
      %228 = vmatpush.bf16.msra.mxu0 0
      %229 = vmatpush.bf16.msra.mxu0 0
      %230 = vmatpush.bf16.msra.mxu0 0
      %231 = vmatpush.bf16.msra.mxu0 0
      %232 = vmatpush.bf16.msra.mxu0 0
      %233 = vmatpush.bf16.msra.mxu0 0
      %234 = vmatpush.bf16.msra.mxu0 %v226
      %235 = vmatpush.bf16.msra.mxu0 %v193
      %236 = vmatmul.bf16.gmra.mxu0 %v223
      %v237 = vpop.f32.mrf.mxu0
      %v238 = vadd.f32 %v218, %v237
      %v239 = vpop.f32.mrf.mxu0
      %240 = vdwg.mxu0
      %s241 = scalar_lea.vmem %s171, 12
      %v242 = vld [vmem:[%s241] sm:$0xf]
      %v243 = vld [vmem:[%s241 + $0x4] sm:$0xf]
      %v244 = vld [vmem:[%s241 + $0x8] sm:$0xf]
      %s245 = scalar_lea.vmem %s1, 4
      %v246 = vld [vmem:[%s245] sm:$0xf]
      %v250 = vunpack.c.l.b16 %v242
      %v251 = vunpack.c.l.b16 %v243
      %v252 = vunpack.c.l.b16 %v244
      %v253 = vpack.c.b16 %v251, %v250
      %v254 = vpack.c.b16 %v252, %v252
      %v257 = vsel %vm200, %v246, 0
      %v260 = vsel %vm204, %v254, 0
      %262 = vmatpush.bf16.msra.mxu0 0
      %263 = vmatpush.bf16.msra.mxu0 0
      %264 = vmatpush.bf16.msra.mxu0 0
      %265 = vmatpush.bf16.msra.mxu0 0
      %266 = vmatpush.bf16.msra.mxu0 0
      %267 = vmatpush.bf16.msra.mxu0 0
      %268 = vmatpush.bf16.msra.mxu0 %v260
      %269 = vmatpush.bf16.msra.mxu0 %v253
      %270 = vmatmul.bf16.gmra.mxu0 %v257
      %v271 = vpop.f32.mrf.mxu0
      %v272 = vadd.f32 0.0, %v271
      %v273 = vpop.f32.mrf.mxu0
      %274 = vdwg.mxu0
      %v275 = vadd.f32 %v238, %v272
      %s276 = scalar_lea.vmem %s1, 12
      %v277 = vld [vmem:[%s276] sm:$0xf]
      %278 = vrot.lane.b32.xlu0 %v253, 120
      %v279 = vpop.permute.xlu0 %278
      %280 = vrot.lane.b32.xlu0 %v254, 120
      %v281 = vpop.permute.xlu0 %280
      %v284 = vsel %vm200, %v277, 0
      %v287 = vsel %vm204, %v281, 0
      %289 = vmatpush.bf16.msra.mxu0 0
      %290 = vmatpush.bf16.msra.mxu0 0
      %291 = vmatpush.bf16.msra.mxu0 0
      %292 = vmatpush.bf16.msra.mxu0 0
      %293 = vmatpush.bf16.msra.mxu0 0
      %294 = vmatpush.bf16.msra.mxu0 0
      %295 = vmatpush.bf16.msra.mxu0 %v287
      %296 = vmatpush.bf16.msra.mxu0 %v279
      %297 = vmatmul.bf16.gmra.mxu0 %v284
      %v298 = vpop.f32.mrf.mxu0
      %v299 = vadd.f32 0.0, %v298
      %v300 = vpop.f32.mrf.mxu0
      %301 = vdwg.mxu0
      %v302 = vadd.f32 %v275, %v299
      %v303 = vpack.c.bf16 %v302, %v302
      %vm304 = vcmask 519168
      %305 = vst.msk [vmem:[%s175] sm:$0xf] %vm304, %v303
      %vm306 = vcmask 523264
      %v307 = vsel %vm306, %v302, 0.0
      %308 = vadd.xlane.f32.xlu0 %v307
      %v309 = vpop.xlane.xlu0 %308
      %v310 = vmul.f32 %v309, 0.015625
      %v311 = vsub.f32 %v302, %v310
      %vm312 = vcmask 7168
      %313 = vst.msk [vmem:[%s179] sm:$0xff] %vm312, %v309
      %v314 = vmul.f32 %v311, %v311
      %v315 = vsel %vm306, %v314, 0.0
      %316 = vadd.xlane.f32.xlu0 %v315
      %v317 = vpop.xlane.xlu0 %316
      %vm318 = vcmask 15368
      %319 = vst.msk [vmem:[%s179] sm:$0xff] %vm318, %v317
      %p320 = scmp.lt.s32.totalorder %s15, 1
      %s321 = scalar_select %p320, %s15, 1
      %s322 = smul.addr %s321, 4
      %s323 = scalar_lea.vmem %s2, %s322
      %p324 = scmp.lt.s32.totalorder %s15, 1
      %s325 = scalar_select %p324, %s15, 1
      %s326 = smul.addr %s325, 8
      %s327 = scalar_lea.vmem %s3, %s326
      // Predicated region
      $region29: #{down_forward.2} parent=27 // pred_check
        %p328 = pneg %p80
      $region30: #{down_forward.2} parent=27 // pred_check_branch
        %330 = sbr.rel (%p328) target = $region32
      $region31: #{down_forward.2} parent=27 // pred_region
        _
      $region32: #{down_forward.2} parent=27 // pred_fallthru
        _
      // Predicated region
      $region33: #{down_forward.2} parent=27 // pred_check
        %p331 = pneg %p106
      $region34: #{down_forward.2} parent=27 // pred_check_branch
        %333 = sbr.rel (%p331) target = $region36
      $region35: #{down_forward.2} parent=27 // pred_region
        _
      $region36: #{down_forward.2} parent=27 // pred_fallthru
        _
    $region28: #{down_forward.2} parent=5 // pred_fallthru
      _
    %p334 = scmp.le.s32.totalorder 2, %s10
    // Predicated region
    $region37: #{down_forward.2} parent=5 // pred_check
      %p335 = pneg %p334
    $region38: #{down_forward.2} parent=5 // pred_check_branch
      %337 = sbr.rel (%p335) target = $region40
    $region39: #{down_forward.2} parent=5 // pred_region
      %s338 = ssub.s32 %s10, 2
      // Predicated region
      $region41: #{down_forward.2} parent=39 // pred_check
        %p339 = pneg %p86
      $region42: #{down_forward.2} parent=39 // pred_check_branch
        %341 = sbr.rel (%p339) target = $region44
      $region43: #{down_forward.2} parent=39 // pred_region
        %p342 = scmp.lt.s32.totalorder %s16, 1
        %s343 = scalar_select %p342, %s16, 1
        %s344 = smul.addr %s343, 4
        %s345 = scalar_lea.vmem %s2, %s344
      $region44: #{down_forward.2} parent=39 // pred_fallthru
        _
      // Predicated region
      $region45: #{down_forward.2} parent=39 // pred_check
        %p346 = pneg %p112
      $region46: #{down_forward.2} parent=39 // pred_check_branch
        %348 = sbr.rel (%p346) target = $region48
      $region47: #{down_forward.2} parent=39 // pred_region
        %p349 = scmp.lt.s32.totalorder %s16, 1
        %s350 = scalar_select %p349, %s16, 1
        %s351 = smul.addr %s350, 8
        %s352 = scalar_lea.vmem %s3, %s351
      $region48: #{down_forward.2} parent=39 // pred_fallthru
        _
    $region40: #{down_forward.2} parent=5 // pred_fallthru
      _
  $region6: #{down_forward.2} parent=0 // loop_footer
    %s14 = sadd.s32 1, %s10
  $region7: #{down_forward.2} parent=0 // loop_footer_branch
    %9 = sbr.rel target = $region3
  $region8: #{down_forward.2} parent=0 // loop_exit
    _

// kernel: down_forward.3
$region0: #{down_forward.3}
  #allocation0 [shape = 'u32[]', space=smem, size = 0x4, offset = 0x4, fixed_abs, tag = 'smem constant byte address 0x4 - core index']
  #allocation1 [shape = 'u32[72,128]{1,0:T(1,128)}', space=vmem, size = 0x9000, scoped, tag = 'internal scratch']
  %s0 = inlined_call_operand.vmem [shape: bf16[2,8,64], index: 0, kind: input, shape index: {}]
  %s1 = inlined_call_operand.vmem [shape: f32[8,1], index: 1, kind: input, shape index: {}]
  %s2 = inlined_call_operand.vmem [shape: f32[8,1], index: 2, kind: input, shape index: {}]
  %s3 = inlined_call_operand.vmem [shape: f32[2,8,64], index: 3, kind: output, shape index: {}]
  %s4 = sld [smem:[#allocation0]]
  $region45: #{down_forward.3} parent=0
    _
  %s6 = ssub.s32 1, %s4
  %s7 = scalar_select 0, %s6, %s4
  loop: start=0, step=1, limit=4
  $region2: #{down_forward.3} parent=0 // loop_pre_header
    _
  $region3: #{down_forward.3} parent=0 // loop_header
    %s9 = sphi 0, %s13
    %p10 = scmp.ge.s32.totalorder %s9, 4
    %s19 = sphi 0, %s21
    %s22 = sphi 0, %s19
    %s23 = sphi 0, %s22
    %s39 = sphi 0, %s23
    %s43 = sphi 0, %s43
    %s45 = sphi 0, %s43
    %s46 = sphi 0, %s45
    %s60 = sphi 0, %s46
    %s64 = sphi 0, %s64
    %s66 = sphi 0, %s64
    %s67 = sphi 0, %s66
    %s81 = sphi 0, %s67
    %s87 = sphi 0, %s89
    %s90 = sphi 0, %s87
    %s91 = sphi 0, %s90
    %s107 = sphi 0, %s91
  $region4: #{down_forward.3} parent=0 // loop_header_branch
    %12 = sbr.rel (%p10) target = $region8
  $region5: #{down_forward.3} parent=0 // loop_body
    %s14 = ssub.s32 %s9, 1
    %s15 = ssub.s32 %s9, 2
    %s16 = sadd.s32 %s9, 1
    %s17 = ssub.s32 %s9, %s16
    %p18 = scmp.eq.s32.totalorder %s17, 0
    %s20 = sadd.s32 %s19, 1
    %s21 = scalar_select %p18, %s19, %s20
    %p24 = pneg %p18
    %p25 = scmp.eq.s32.totalorder %s9, 1
    %p26 = por %p24, %p25
    %p27 = scmp.ne.s32.totalorder %s19, %s22
    %p28 = scmp.eq.s32.totalorder %s9, 0
    %p29 = por %p27, %p28
    %p30 = scmp.ne.s32.totalorder %s19, %s22
    %p31 = scmp.eq.s32.totalorder %s14, 1
    %p32 = por %p30, %p31
    %p33 = scmp.ne.s32.totalorder %s22, %s23
    %p34 = scmp.eq.s32.totalorder %s14, 0
    %p35 = por %p33, %p34
    %p36 = scmp.ne.s32.totalorder %s22, %s23
    %p37 = scmp.eq.s32.totalorder %s15, 1
    %p38 = por %p36, %p37
    %p40 = scmp.ne.s32.totalorder %s23, %s39
    %p41 = scmp.eq.s32.totalorder %s15, 0
    %p42 = por %p40, %p41
    %s44 = sadd.s32 %s43, 1
    %p47 = scmp.eq.s32.totalorder %s9, 1
    %p48 = scmp.ne.s32.totalorder %s43, %s45
    %p49 = scmp.eq.s32.totalorder %s9, 0
    %p50 = por %p48, %p49
    %p51 = scmp.ne.s32.totalorder %s43, %s45
    %p52 = scmp.eq.s32.totalorder %s14, 1
    %p53 = por %p51, %p52
    %p54 = scmp.ne.s32.totalorder %s45, %s46
    %p55 = scmp.eq.s32.totalorder %s14, 0
    %p56 = por %p54, %p55
    %p57 = scmp.ne.s32.totalorder %s45, %s46
    %p58 = scmp.eq.s32.totalorder %s15, 1
    %p59 = por %p57, %p58
    %p61 = scmp.ne.s32.totalorder %s46, %s60
    %p62 = scmp.eq.s32.totalorder %s15, 0
    %p63 = por %p61, %p62
    %s65 = sadd.s32 %s64, 1
    %p68 = scmp.eq.s32.totalorder %s9, 1
    %p69 = scmp.ne.s32.totalorder %s64, %s66
    %p70 = scmp.eq.s32.totalorder %s9, 0
    %p71 = por %p69, %p70
    %p72 = scmp.ne.s32.totalorder %s64, %s66
    %p73 = scmp.eq.s32.totalorder %s14, 1
    %p74 = por %p72, %p73
    %p75 = scmp.ne.s32.totalorder %s66, %s67
    %p76 = scmp.eq.s32.totalorder %s14, 0
    %p77 = por %p75, %p76
    %p78 = scmp.ne.s32.totalorder %s66, %s67
    %p79 = scmp.eq.s32.totalorder %s15, 1
    %p80 = por %p78, %p79
    %p82 = scmp.ne.s32.totalorder %s67, %s81
    %p83 = scmp.eq.s32.totalorder %s15, 0
    %p84 = por %p82, %p83
    %s85 = ssub.s32 %s9, %s16
    %p86 = scmp.eq.s32.totalorder %s85, 0
    %s88 = sadd.s32 %s87, 1
    %s89 = scalar_select %p86, %s87, %s88
    %p92 = pneg %p86
    %p93 = scmp.eq.s32.totalorder %s9, 1
    %p94 = por %p92, %p93
    %p95 = scmp.ne.s32.totalorder %s87, %s90
    %p96 = scmp.eq.s32.totalorder %s9, 0
    %p97 = por %p95, %p96
    %p98 = scmp.ne.s32.totalorder %s87, %s90
    %p99 = scmp.eq.s32.totalorder %s14, 1
    %p100 = por %p98, %p99
    %p101 = scmp.ne.s32.totalorder %s90, %s91
    %p102 = scmp.eq.s32.totalorder %s14, 0
    %p103 = por %p101, %p102
    %p104 = scmp.ne.s32.totalorder %s90, %s91
    %p105 = scmp.eq.s32.totalorder %s15, 1
    %p106 = por %p104, %p105
    %p108 = scmp.ne.s32.totalorder %s91, %s107
    %p109 = scmp.eq.s32.totalorder %s15, 0
    %p110 = por %p108, %p109
    %p111 = scmp.le.s32.totalorder 1, %s9
    %p112 = scmp.lt.s32.totalorder %s9, 3
    %p113 = pnand %p111, %p112
    %p114 = pneg %p113
    // Predicated region
    $region9: #{down_forward.3} parent=5 // pred_check
      _
    $region10: #{down_forward.3} parent=5 // pred_check_branch
      %116 = sbr.rel (%p113) target = $region12
    $region11: #{down_forward.3} parent=5 // pred_region
      %s117 = ssub.s32 %s9, 1
      // Predicated region
      $region13: #{down_forward.3} parent=11 // pred_check
        %p118 = pneg %p56
      $region14: #{down_forward.3} parent=11 // pred_check_branch
        %120 = sbr.rel (%p118) target = $region16
      $region15: #{down_forward.3} parent=11 // pred_region
        _
      $region16: #{down_forward.3} parent=11 // pred_fallthru
        _
      // Predicated region
      $region17: #{down_forward.3} parent=11 // pred_check
        %p121 = pneg %p77
      $region18: #{down_forward.3} parent=11 // pred_check_branch
        %123 = sbr.rel (%p121) target = $region20
      $region19: #{down_forward.3} parent=11 // pred_region
        _
      $region20: #{down_forward.3} parent=11 // pred_fallthru
        _
    $region12: #{down_forward.3} parent=5 // pred_fallthru
      _
    %p124 = scmp.lt.s32.totalorder %s9, 2
    // Predicated region
    $region21: #{down_forward.3} parent=5 // pred_check
      %p125 = pneg %p124
    $region22: #{down_forward.3} parent=5 // pred_check_branch
      %127 = sbr.rel (%p125) target = $region24
    $region23: #{down_forward.3} parent=5 // pred_region
      // Predicated region
      $region25: #{down_forward.3} parent=23 // pred_check
        %p128 = pneg %p29
      $region26: #{down_forward.3} parent=23 // pred_check_branch
        %130 = sbr.rel (%p128) target = $region28
      $region27: #{down_forward.3} parent=23 // pred_region
        %p131 = scmp.lt.s32.totalorder %s9, 1
        %s132 = scalar_select %p131, %s9, 1
        %s133 = smul.addr %s132, 4
        %s134 = scalar_lea.vmem %s0, %s133
      $region28: #{down_forward.3} parent=23 // pred_fallthru
        _
    $region24: #{down_forward.3} parent=5 // pred_fallthru
      _
    %p135 = scmp.le.s32.totalorder 1, %s9
    %p136 = scmp.lt.s32.totalorder %s9, 3
    %p137 = pnand %p135, %p136
    %p138 = pneg %p137
    // Predicated region
    $region29: #{down_forward.3} parent=5 // pred_check
      _
    $region30: #{down_forward.3} parent=5 // pred_check_branch
      %140 = sbr.rel (%p137) target = $region32
    $region31: #{down_forward.3} parent=5 // pred_region
      %s141 = ssub.s32 %s9, 1
      %p142 = scmp.lt.s32.totalorder %s14, 1
      %s143 = scalar_select %p142, %s14, 1
      %s144 = smul.addr %s143, 4
      %s145 = scalar_lea.vmem %s0, %s144
      %p146 = pneg %p35
      %p147 = pneg %p32
      %p148 = pneg %p56
      %p149 = pneg %p53
      %p150 = pneg %p77
      %p151 = pneg %p74
      %p152 = pneg %p103
      %p153 = pneg %p100
      %p154 = scmp.lt.s32.totalorder %s14, 1
      %s155 = scalar_select %p154, %s14, 1
      %s156 = smul.addr %s155, 8
      %s157 = scalar_lea.vmem %s3, %s156
      %p158 = scmp.lt.s32.totalorder %s14, 1
      %s159 = scalar_select %p158, %s14, 1
      %s160 = smul.addr %s159, 4
      %s161 = scalar_lea.vmem %s0, %s160
      %p162 = scmp.lt.s32.totalorder %s14, 1
      %s163 = scalar_select %p162, %s14, 1
      %s164 = smul.addr %s163, 8
      %s165 = scalar_lea.vmem %s3, %s164
      %v166 = vld [vmem:[%s161] sm:$0xf]
      %v167 = vunpack.c.l.bf16 %v166
      %v168 = vld [vmem:[%s1] sm:$0xff]
      %170 = vset.pattern.permute.xlu0 0
      %171 = vperm.xlu0 %170, %v168
      %v172 = vpop.permute.xlu0 %171
      %v174 = vmul.f32 %v167, %v172
      %v175 = vld [vmem:[%s2] sm:$0xff]
      %177 = vset.pattern.permute.xlu0 0
      %178 = vperm.xlu0 %177, %v175
      %v179 = vpop.permute.xlu0 %178
      %v181 = vadd.f32 %v174, %v179
      %v182 = vmax.f32 %v181, 0.0
      %vm183 = vcmask 523264
      %184 = vst.msk [vmem:[%s165] sm:$0xff] %vm183, %v182
      %p185 = scmp.lt.s32.totalorder %s14, 1
      %s186 = scalar_select %p185, %s14, 1
      %s187 = smul.addr %s186, 8
      %s188 = scalar_lea.vmem %s3, %s187
      // Predicated region
      $region33: #{down_forward.3} parent=31 // pred_check
        %p189 = pneg %p100
      $region34: #{down_forward.3} parent=31 // pred_check_branch
        %191 = sbr.rel (%p189) target = $region36
      $region35: #{down_forward.3} parent=31 // pred_region
        _
      $region36: #{down_forward.3} parent=31 // pred_fallthru
        _
    $region32: #{down_forward.3} parent=5 // pred_fallthru
      _
    %p192 = scmp.le.s32.totalorder 2, %s9
    // Predicated region
    $region37: #{down_forward.3} parent=5 // pred_check
      %p193 = pneg %p192
    $region38: #{down_forward.3} parent=5 // pred_check_branch
      %195 = sbr.rel (%p193) target = $region40
    $region39: #{down_forward.3} parent=5 // pred_region
      %s196 = ssub.s32 %s9, 2
      // Predicated region
      $region41: #{down_forward.3} parent=39 // pred_check
        %p197 = pneg %p106
      $region42: #{down_forward.3} parent=39 // pred_check_branch
        %199 = sbr.rel (%p197) target = $region44
      $region43: #{down_forward.3} parent=39 // pred_region
        %p200 = scmp.lt.s32.totalorder %s15, 1
        %s201 = scalar_select %p200, %s15, 1
        %s202 = smul.addr %s201, 8
        %s203 = scalar_lea.vmem %s3, %s202
      $region44: #{down_forward.3} parent=39 // pred_fallthru
        _
    $region40: #{down_forward.3} parent=5 // pred_fallthru
      _
  $region6: #{down_forward.3} parent=0 // loop_footer
    %s13 = sadd.s32 1, %s9
  $region7: #{down_forward.3} parent=0 // loop_footer_branch
    %8 = sbr.rel target = $region3
  $region8: #{down_forward.3} parent=0 // loop_exit
    _

</llo_original>
